<compile_context>
chip_gen: v7x
topology: tpu7x:2x2x1
jax: 0.10.0
libtpu: 0.0.40
codegen_flags: <defaults>
</compile_context>

<pallas_src>
import jax
import jax.numpy as jnp
from jax.experimental import pallas as pl
from jax.experimental.pallas import tpu as pltpu

_LANE = 128


# ------------------------------ Pallas kernel ------------------------------ #

def _matmul_kernel(x_ref, w_ref, o_ref):
    """One (bm, bn) tile of Yt = Xt @ Wt.

    k (reduction) is the innermost grid axis; the f32 output block stays
    resident in VMEM across it and is accumulated in place (no scratch).
    """
    @pl.when(pl.program_id(2) == 0)
    def _():
        o_ref[...] = jnp.zeros_like(o_ref)

    o_ref[...] += jnp.dot(x_ref[...], w_ref[...],
                          preferred_element_type=jnp.float32)


def _round_up(a, b):
    return -(-a // b) * b


def _pallas_matmul(xt, wt):
    """Yt = Xt @ Wt on the MXU, f32 output.

    Xt : (M, K)   activations, M = batch*electrode (sublane axis, small)
    Wt : (K, Np)  fused wavelet matrix, Np a multiple of 128 (lane axis, large)
    """
    M, K = xt.shape
    K2, Np = wt.shape
    assert K == K2 and Np % _LANE == 0

    # --- M (sublane) tiles: full-extent block when small (always legal). ---
    if M <= 512:
        bm, Mp = M, M
    else:
        bm = 512
        Mp = _round_up(M, bm)
        if Mp != M:
            xt = jnp.pad(xt, ((0, Mp - M), (0, 0)))   # tiny (activations only)

    # --- K (reduction) tiles: seq_len is a power of `stride`, so a power-of-two
    # tile divides it exactly whenever stride is 2/4/...; otherwise fall back to
    # full extent (still correct). No K padding is ever introduced. ---
    bk = K
    if K > 512:
        for cand in (512, 256, 128):
            if K % cand == 0:
                bk = cand
                break

    # --- N (lane) tiles: 512-class tiles, always a multiple of 128. ---
    bn = Np
    for cand in (512, 256, 128):
        if Np > cand and Np % cand == 0:
            bn = cand
            break
    # v7x megacore: keep the parallel (i, j) tile count even when lane alignment
    # allows, so both TensorCores get work (perf-neutral on v5e/v6e).
    if ((Mp // bm) * (Np // bn)) % 2 == 1 and bn >= 2 * _LANE and (bn // 2) % _LANE == 0:
        bn //= 2

    grid = (Mp // bm, Np // bn, K // bk)
    y = pl.pallas_call(
        _matmul_kernel,
        out_shape=jax.ShapeDtypeStruct((Mp, Np), jnp.float32),
        grid=grid,
        in_specs=[
            pl.BlockSpec((bm, bk), lambda i, j, k: (i, k)),
            pl.BlockSpec((bk, bn), lambda i, j, k: (k, j)),
        ],
        out_specs=pl.BlockSpec((bm, bn), lambda i, j, k: (i, j)),
        compiler_params=pltpu.CompilerParams(
            dimension_semantics=("parallel", "parallel", "arbitrary"),
        ),
    )(xt, wt)
    return y[:M] if Mp != M else y


# --------------------------- parameter-matrix glue -------------------------- #

def _conv_down_matrix(S, w, scale, stride, L):
    """M (Sh, S): out[t] = scale * sum_k w[k] * padded[t*stride + k], with the
    causal zero pad (L-1 leading zeros) folded in so M acts on the unpadded b."""
    Sh = (S - 1) // stride + 1
    t = jnp.arange(Sh)[:, None] * stride
    j = jnp.arange(S)[None, :]
    k = j - t + (L - 1)                      # filter-tap index for column j
    valid = (k >= 0) & (k < L)
    return (scale * jnp.where(valid, w[jnp.clip(k, 0, L - 1)], 0.0)).astype(jnp.float32)


def _upsample_matrix(sh, times, w_up, stride):
    """Composite matrix of `times` successive ConvTranspose2d((stride,1), stride)."""
    U = jnp.eye(sh, dtype=jnp.float32)
    m = sh
    for _ in range(times):
        o = jnp.arange(m * stride)[:, None]
        t = jnp.arange(m)[None, :]
        r = o - t * stride
        valid = (r >= 0) & (r < stride)
        U1 = jnp.where(valid, w_up[jnp.clip(r, 0, stride - 1)], 0.0).astype(jnp.float32)
        U = U1 @ U
        m *= stride
    return U


def _build_forward_matrix(params, S0, conv_length, stride, level):
    """Compose the whole (linear) forward into one weight matrix W (R, S0).

    Row layout of W:
      [0, L*S0)          upsampled detail coefs, level-major   -> scalegram
      [L*S0, (L+1)*S0)   sum over levels                       -> decomposition
      [(L+1)*S0, R)      raw detail coefs, level i has Sh_i rows
    """
    w_l, w_h, ld, hd, w_up = params
    B_mat = jnp.eye(S0, dtype=jnp.float32)        # maps x -> current approximation b_i
    a_full_mats, a_coef_mats = [], []
    for i in range(level):
        S = B_mat.shape[0]
        Mh = _conv_down_matrix(S, w_h, hd, stride, conv_length)
        Ml = _conv_down_matrix(S, w_l, ld, stride, conv_length)
        A_coef = Mh @ B_mat                       # (Sh, S0)
        B_mat = Ml @ B_mat                        # (Sh, S0)
        Sh = A_coef.shape[0]
        U = _upsample_matrix(Sh, i + 1, w_up, stride)
        a_full = U @ A_coef                       # (Sh * stride**(i+1), S0)
        assert a_full.shape[0] == S0, (
            "seq length must be a power of `stride` so every upsampled level "
            "returns to the original length (same torch.stack limitation)")
        a_full_mats.append(a_full)
        a_coef_mats.append(A_coef)
        if B_mat.shape[0] < stride:
            break
    W = jnp.concatenate(a_full_mats + [sum(a_full_mats)] + a_coef_mats, axis=0)
    coef_sizes = tuple(int(m.shape[0]) for m in a_coef_mats)
    return W, coef_sizes


# ------------------------------ forward factory ------------------------------ #

def make_wavelet_cnn(params, seq_len, conv_length=32, stride=2, level=100,
                     compute_dtype=jnp.bfloat16):
    """Build the fused forward ONCE per parameter set.

    Returns a jitted forward(x) -> (decomposition, scalegram, a_coef) matching
    Wavelet_cnn.forward for x of shape (B, 1, seq_len, E).  The fused matrix is
    transposed, cast to compute_dtype and lane-padded here (init time), never
    inside the per-call path.
    """
    W, coef_sizes = _build_forward_matrix(params, seq_len, conv_length, stride, level)
    R = int(W.shape[0])
    Rp = _round_up(max(R, _LANE), _LANE)
    Wt = jnp.pad(W.T, ((0, 0), (0, Rp - R))).astype(compute_dtype)   # (S0, Rp), once
    L = len(coef_sizes)
    S0 = seq_len

    @jax.jit
    def forward(x):
        B, C, E = x.shape[0], x.shape[1], x.shape[3]
        assert C == 1 and x.shape[2] == S0
        M = B * E
        # Signal -> (B*E, S0): batch*electrode on sublanes, seq on lanes of X.
        # Single cast to compute_dtype (no dead f32 intermediate).
        Xt = x[:, 0].transpose(0, 2, 1).reshape(M, S0).astype(Wt.dtype)

        Yt = _pallas_matmul(Xt, Wt)                   # (B*E, Rp), f32

        Y3 = Yt.reshape(B, E, Rp)
        scalegram = (Y3[:, :, :L * S0]
                     .reshape(B, E, L, S0)
                     .transpose(0, 2, 3, 1)[:, None])         # (B, 1, L, S0, E)
        decomposition = (Y3[:, :, L * S0:(L + 1) * S0]
                         .transpose(0, 2, 1)[:, None])        # (B, 1, S0, E)
        a_coef = []
        off = (L + 1) * S0
        for sh in coef_sizes:
            a_coef.append(Y3[:, :, off:off + sh].transpose(0, 2, 1)[:, None])
            off += sh
        return decomposition, scalegram, a_coef

    return forward


# ------------------------- pure-JAX reference check ------------------------- #

def _reference_forward(x, params, conv_length=32, stride=2, level=100):
    w_l, w_h, ld, hd, w_up = params
    B, _, S0, E = x.shape
    pad = conv_length - 1
    b = x[:, 0].astype(jnp.float32)
    a_list, a_coef = [], []
    for i in range(level):
        S = b.shape[1]
        padded = jnp.pad(b, ((0, 0), (pad, 0), (0, 0)))
        conv_h = sum(w_h[k] * padded[:, k:k + S, :] for k in range(conv_length))
        conv_l = sum(w_l[k] * padded[:, k:k + S, :] for k in range(conv_length))
        a = hd * conv_h[:, ::stride, :]
        b = ld * conv_l[:, ::stride, :]
        a_coef.append(a[:, None])
        for _ in range(i + 1):
            m = a.shape[1]
            up = jnp.zeros((B, m * stride, E), dtype=jnp.float32)
            for r in range(stride):
                up = up.at[:, r::stride, :].set(w_up[r] * a)
            a = up
        a_list.append(a)
        if b.shape[1] < stride:
            break
    scalegram = jnp.stack(a_list, axis=1)[:, None]
    decomposition = scalegram.sum(axis=2)
    return decomposition, scalegram, a_coef


# ----------------------------------- main ----------------------------------- #

if __name__ == "__main__":
    conv_length, stride, level = 32, 2, 100
    B, S, E = 2, 16, 8

    key = jax.random.PRNGKey(0)
    kx, kl, kh, ku = jax.random.split(key, 4)
    x = jax.random.normal(kx, (B, 1, S, E), dtype=jnp.float32)

    # Filters as in init_filter(): low-pass = 1/L, high-pass alternates sign
    # (even taps negated).  The 1x1 downsample convs and the transpose-conv
    # upsample keep PyTorch's default random init, drawn deterministically here.
    w_l = jnp.full((conv_length,), 1.0 / conv_length, dtype=jnp.float32)
    w_h = w_l * jnp.where(jnp.arange(conv_length) % 2 == 0, -1.0, 1.0).astype(jnp.float32)
    ld = jax.random.uniform(kl, (), minval=-1.0, maxval=1.0, dtype=jnp.float32)
    hd = jax.random.uniform(kh, (), minval=-1.0, maxval=1.0, dtype=jnp.float32)
    w_up = jax.random.uniform(ku, (stride,), minval=-1.0, maxval=1.0, dtype=jnp.float32)
    params = (w_l, w_h, ld, hd, w_up)

    # Build each forward ONCE (fused matrix hoisted out of the per-call path).
    fwd_bf16 = make_wavelet_cnn(params, S, conv_length, stride, level,
                                compute_dtype=jnp.bfloat16)
    fwd_f32 = make_wavelet_cnn(params, S, conv_length, stride, level,
                               compute_dtype=jnp.float32)

    # bf16 operands, f32 MXU accumulation (production configuration).
    dec, scal, coefs = fwd_bf16(x)
    jax.block_until_ready(dec)
    jax.block_until_ready(scal)
    for c in coefs:
        jax.block_until_ready(c)

    # f32 path for the tight numerical check.
    dec32, scal32, coefs32 = fwd_f32(x)
    jax.block_until_ready(dec32)

    dec_r, scal_r, coefs_r = _reference_forward(x, params, conv_length, stride, level)

    n_levels = len(coefs)
    assert dec.shape == (B, 1, S, E)
    assert scal.shape == (B, 1, n_levels, S, E)
    assert len(coefs) == len(coefs_r)

    ok = bool(jnp.allclose(dec32, dec_r, atol=1e-4, rtol=1e-4))
    ok &= bool(jnp.allclose(scal32, scal_r, atol=1e-4, rtol=1e-4))
    ok &= all(bool(jnp.allclose(a, b, atol=1e-4, rtol=1e-4))
              for a, b in zip(coefs32, coefs_r))
    # bf16 path: loose tolerance (bf16 operands, f32 accumulation).
    ok &= bool(jnp.allclose(dec, dec_r, atol=5e-2, rtol=5e-2))
    ok &= bool(jnp.allclose(scal, scal_r, atol=5e-2, rtol=5e-2))

    if ok:
        print("KERNEL_OK")
    else:
        raise SystemExit("Pallas kernel result mismatch vs reference")
</pallas_src>

<mosaic_0001>
module attributes {stable_mosaic.version = 11 : i64} {
  func.func @_matmul_kernel(%arg0: i32, %arg1: i32, %arg2: i32, %arg3: memref<16x16xbf16, #tpu.memory_space<vmem>>, %arg4: memref<16x128xbf16, #tpu.memory_space<vmem>>, %arg5: memref<16x128xf32, #tpu.memory_space<vmem>>) attributes {dimension_semantics = [#tpu.dimension_semantics<parallel>, #tpu.dimension_semantics<parallel>, #tpu.dimension_semantics<arbitrary>], iteration_bounds = array<i64: 1, 1, 1>, scalar_prefetch = 0 : i64, scratch_operands = 0 : i64, tpu.core_type = #tpu.core_type<tc>, window_params = [{transform_indices = @transform_0, window_bounds = array<i64: 16, 16>}, {transform_indices = @transform_1, window_bounds = array<i64: 16, 128>}, {transform_indices = @transform_2, window_bounds = array<i64: 16, 128>}]} {
    %c0_i32 = arith.constant 0 : i32
    %0 = arith.cmpi eq, %arg2, %c0_i32 : i32
    %1 = arith.extui %0 : i1 to i32
    %c0_i32_0 = arith.constant 0 : i32
    %2 = arith.cmpi ne, %1, %c0_i32_0 : i32
    scf.if %2 {
      %cst_8 = arith.constant 0.000000e+00 : f32
      %9 = vector.broadcast %cst_8 : f32 to vector<16x128xf32>
      %c0_9 = arith.constant 0 : index
      %c0_10 = arith.constant 0 : index
      %10 = vector.load %arg5[%c0_9, %c0_10] : memref<16x128xf32, #tpu.memory_space<vmem>>, vector<16x128xf32>
      tpu.vector_store %arg5[%c0_9, %c0_10], %9 {strides = array<i32>} : memref<16x128xf32, #tpu.memory_space<vmem>>, vector<16x128xf32>,
    } else {
    }
    %c0 = arith.constant 0 : index
    %c0_1 = arith.constant 0 : index
    %3 = vector.load %arg5[%c0, %c0_1] : memref<16x128xf32, #tpu.memory_space<vmem>>, vector<16x128xf32>
    %c0_2 = arith.constant 0 : index
    %c0_3 = arith.constant 0 : index
    %4 = vector.load %arg3[%c0_2, %c0_3] : memref<16x16xbf16, #tpu.memory_space<vmem>>, vector<16x16xbf16>
    %c0_4 = arith.constant 0 : index
    %c0_5 = arith.constant 0 : index
    %5 = vector.load %arg4[%c0_4, %c0_5] : memref<16x128xbf16, #tpu.memory_space<vmem>>, vector<16x128xbf16>
    %cst = arith.constant dense<0.000000e+00> : vector<16x128xf32>
    %6 = tpu.matmul %4, %5, %cst {dimension_numbers = #tpu.dot_dimension_numbers<[1], [0], [0], [1], [0, 0, 1, 1], [], []>} : vector<16x16xbf16>, vector<16x128xbf16>, vector<16x128xf32> -> vector<16x128xf32>
    %7 = arith.addf %3, %6 : vector<16x128xf32>
    %c0_6 = arith.constant 0 : index
    %c0_7 = arith.constant 0 : index
    %8 = vector.load %arg5[%c0_6, %c0_7] : memref<16x128xf32, #tpu.memory_space<vmem>>, vector<16x128xf32>
    tpu.vector_store %arg5[%c0_6, %c0_7], %7 {strides = array<i32>} : memref<16x128xf32, #tpu.memory_space<vmem>>, vector<16x128xf32>,
    return
  }
  func.func @transform_0(%arg0: i32, %arg1: i32, %arg2: i32) -> (i32, i32) {
    %c0_i32 = arith.constant 0 : i32
    return %arg0, %arg2 : i32, i32
  }
  func.func @transform_1(%arg0: i32, %arg1: i32, %arg2: i32) -> (i32, i32) {
    %c0_i32 = arith.constant 0 : i32
    return %arg2, %arg1 : i32, i32
  }
  func.func @transform_2(%arg0: i32, %arg1: i32, %arg2: i32) -> (i32, i32) {
    %c0_i32 = arith.constant 0 : i32
    return %arg0, %arg1 : i32, i32
  }
}

</mosaic_0001>

<llo_original>
// kernel: forward.1
$region0: #{forward.1}
  #allocation0 [shape = 'u32[]', space=smem, size = 0x4, offset = 0x4, fixed_abs, tag = 'smem constant byte address 0x4 - core index']
  #allocation1 [shape = 'u32[144,128]{1,0:T(1,128)}', space=vmem, size = 0x12000, scoped, tag = 'internal scratch']
  %s0 = inlined_call_operand.vmem [shape: bf16[16,16], index: 0, kind: input, shape index: {}]
  %s1 = inlined_call_operand.vmem [shape: bf16[16,128], index: 1, kind: input, shape index: {}]
  %s2 = inlined_call_operand.vmem [shape: f32[16,128], index: 2, kind: output, shape index: {}]
  %s3 = sld [smem:[#allocation0]]
  $region22: #{forward.1} parent=0
    _
  %s5 = ssub.s32 1, %s3
  %s6 = scalar_select 0, %s5, %s3
  // Predicated region
  $region2: #{forward.1} parent=0 // pred_check
    _
  $region3: #{forward.1} parent=0 // pred_check_branch
    %8 = sbr.rel (0) target = $region5
  $region4: #{forward.1} parent=0 // pred_region
    _
  $region5: #{forward.1} parent=0 // pred_fallthru
    _
  // Predicated region
  $region6: #{forward.1} parent=0 // pred_check
    _
  $region7: #{forward.1} parent=0 // pred_check_branch
    %10 = sbr.rel (0) target = $region9
  $region8: #{forward.1} parent=0 // pred_region
    _
  $region9: #{forward.1} parent=0 // pred_fallthru
    _
  %p12 = scmp.eq.s32.totalorder 0, 0
  // Predicated region
  $region10: #{forward.1} parent=0 // pred_check
    %p13 = pneg %p12
  $region11: #{forward.1} parent=0 // pred_check_branch
    %15 = sbr.rel (%p13) target = $region13
  $region12: #{forward.1} parent=0 // pred_region
    %16 = vst [vmem:[%s2] sm:$0xff] 0.0
    %17 = vst [vmem:[%s2 + $0x8] sm:$0xff] 0.0
  $region13: #{forward.1} parent=0 // pred_fallthru
    _
  %v18 = vld [vmem:[%s2] sm:$0xff]
  %v19 = vld [vmem:[%s2 + $0x8] sm:$0xff]
  %v20 = vld [vmem:[%s0] sm:$0xf]
  %v21 = vld [vmem:[%s0 + $0x4] sm:$0xf]
  %v22 = vld [vmem:[%s1] sm:$0xf]
  %v23 = vld [vmem:[%s1 + $0x4] sm:$0xf]
  %v26 = vunpack.c.l.b16 %v20
  %v27 = vunpack.c.l.b16 %v21
  %v28 = vpack.c.b16 %v27, %v26
  %v31 = vunpack.c.l.b16 %v22
  %v32 = vunpack.c.l.b16 %v23
  %v33 = vpack.c.b16 %v32, %v31
  %vm35 = vcmask 130048
  %v37 = vsel %vm35, %v28, 0
  %39 = vmatprep.subr.bf16.mxu0 0
  %40 = vmatpush1.bf16.msra.mxu0 %v33
  %41 = vmatprep.subr.bf16.mxu0 0
  %42 = vmatpush1.bf16.msra.mxu0 0
  %43 = vmatprep.subr.bf16.mxu0 0
  %44 = vmatpush1.bf16.msra.mxu0 0
  %45 = vmatprep.subr.bf16.mxu0 0
  %46 = vmatpush1.bf16.msra.mxu0 0
  %47 = vmatprep.subr.bf16.mxu0 0
  %48 = vmatpush1.bf16.msra.mxu0 0
  %49 = vmatprep.subr.bf16.mxu0 0
  %50 = vmatpush1.bf16.msra.mxu0 0
  %51 = vmatprep.subr.bf16.mxu0 0
  %52 = vmatpush1.bf16.msra.mxu0 0
  %53 = vmatprep.subr.bf16.mxu0 0
  %54 = vmatpush1.bf16.msra.mxu0 0
  %55 = vmatprep.subr.bf16.mxu0 0
  %56 = vmatpush1.bf16.msra.mxu0 0
  %57 = vmatprep.subr.bf16.mxu0 0
  %58 = vmatpush1.bf16.msra.mxu0 0
  %59 = vmatprep.subr.bf16.mxu0 0
  %60 = vmatpush1.bf16.msra.mxu0 0
  %61 = vmatprep.subr.bf16.mxu0 0
  %62 = vmatpush1.bf16.msra.mxu0 0
  %63 = vmatprep.subr.bf16.mxu0 0
  %64 = vmatpush1.bf16.msra.mxu0 0
  %65 = vmatprep.subr.bf16.mxu0 0
  %66 = vmatpush1.bf16.msra.mxu0 0
  %67 = vmatprep.subr.bf16.mxu0 0
  %68 = vmatpush1.bf16.msra.mxu0 0
  %69 = vmatprep.subr.bf16.mxu0 0
  %70 = vmatpush1.bf16.msra.mxu0 0
  %71 = vmatprep.mubr.bf16.mxu0 0
  %72 = vmatmul.mubr.bf16.gmra.mrb[0].mxu0 %v37
  %v73 = vpop.f32.mrb[0].mxu0
  %v74 = vadd.f32 0.0, %v73
  %v75 = vpop.f32.mrb[0].mxu0
  %v76 = vpop.f32.mrb[0].mxu0
  %v77 = vadd.f32 0.0, %v76
  %v78 = vpop.f32.mrb[0].mxu0
  %79 = vdwg.mxu0
  %v80 = vadd.f32 %v18, %v74
  %v81 = vadd.f32 %v19, %v77
  %82 = vst [vmem:[%s2] sm:$0xff] %v80
  %83 = vst [vmem:[%s2 + $0x8] sm:$0xff] %v81
  // Predicated region
  $region14: #{forward.1} parent=0 // pred_check
    _
  $region15: #{forward.1} parent=0 // pred_check_branch
    %85 = sbr.rel (0) target = $region17
  $region16: #{forward.1} parent=0 // pred_region
    _
  $region17: #{forward.1} parent=0 // pred_fallthru
    _
  // Predicated region
  $region18: #{forward.1} parent=0 // pred_check
    _
  $region19: #{forward.1} parent=0 // pred_check_branch
    %87 = sbr.rel (0) target = $region21
  $region20: #{forward.1} parent=0 // pred_region
    _
  $region21: #{forward.1} parent=0 // pred_fallthru
    _

</llo_original>
